<compile_context>
chip_gen: v6e
topology: v6e:2x2x1
jax: 0.10.0
libtpu: 0.0.40
codegen_flags: <defaults>
</compile_context>

<pallas_src>
import functools

import jax
import jax.numpy as jnp
from jax.experimental import pallas as pl
from jax.experimental.pallas import tpu as pltpu


# --------------------------------------------------------------------------- #
# Tiling / VMEM policy (conservative across v5e / v6e / v7x)
# --------------------------------------------------------------------------- #
_MIN_ROWS = 8                       # sublane alignment for the second-minor dim
_BLOCK_VMEM_BUDGET = 32 << 20       # bytes spent on (num_refs * 2) pipeline blocks
_VMEM_LIMIT_BYTES = 48 << 20        # below v7x 64 MiB physical; above v5e/v6e defaults
_PER_BLOCK_CAP = 8 << 20            # mem-bound sweet spot; >8 MiB is diminishing returns


def _pick_row_tile(n_rows, d, itemsize, num_refs,
                   vmem_budget=_BLOCK_VMEM_BUDGET):
    """Largest (8,128)-friendly row tile such that num_refs double-buffered
    blocks fit the VMEM budget, with >= 2 grid steps when rows permit
    (so v7x can shard the 'parallel' axis across its 2 TensorCores)."""
    row_bytes = d * itemsize
    per_block = vmem_budget // (num_refs * 2)          # 2 = double buffering
    per_block = min(per_block, _PER_BLOCK_CAP)
    tm = max(per_block // row_bytes, 1)
    tm = max((tm // _MIN_ROWS) * _MIN_ROWS, _MIN_ROWS)

    rows_padded_min = -(-n_rows // _MIN_ROWS) * _MIN_ROWS
    # Prefer at least 2 grid iterations when the array has >= 2 tiles worth of rows.
    if tm * 2 > rows_padded_min and rows_padded_min >= 2 * _MIN_ROWS:
        half = -(-n_rows // 2)
        tm = min(tm, -(-half // _MIN_ROWS) * _MIN_ROWS)
    tm = min(tm, rows_padded_min)

    # Rebalance: keep the same number of grid steps but shrink tm to minimize
    # padded (wasted) rows.
    g = -(-n_rows // tm)
    tm = -(-(-(-n_rows // g)) // _MIN_ROWS) * _MIN_ROWS
    return max(tm, _MIN_ROWS)


def _pad_rows(x2, tm):
    """Pad the row dim up to a multiple of tm (padded rows are discarded later)."""
    n_rows = x2.shape[0]
    n_pad = -(-n_rows // tm) * tm
    if n_pad != n_rows:
        x2 = jnp.pad(x2, ((0, n_pad - n_rows), (0, 0)))
    return x2, n_pad


# --------------------------------------------------------------------------- #
# Kernels
# --------------------------------------------------------------------------- #
def _layernorm_kernel(alpha_ref, bias_ref, x_ref, o_ref, *, eps, d):
    """Row-wise LayerNorm (torch.std / Bessel-corrected) on a (tm, d) tile."""
    x = x_ref[...].astype(jnp.float32)                   # f32 math on the VPU
    mean = jnp.mean(x, axis=-1, keepdims=True)           # (tm, 1)
    diff = x - mean
    # torch.std default is unbiased (divide by d - 1), NOT the usual LN variance.
    # NOTE: d == 1 yields inf/nan, matching torch behavior.
    var = jnp.sum(diff * diff, axis=-1, keepdims=True) * (1.0 / (d - 1))
    std = jnp.sqrt(var)
    inv = 1.0 / (std + eps)                               # exact per-row reciprocal
    scale = alpha_ref[0] * inv                            # fold scalar alpha (SMEM)
    o_ref[...] = (diff * scale + bias_ref[0]).astype(o_ref.dtype)


def _residual_add_kernel(x_ref, y_ref, o_ref):
    """out = x + dropout(y) with dropout(p=0) == identity (native-dtype add)."""
    o_ref[...] = x_ref[...] + y_ref[...].astype(x_ref.dtype)


# --------------------------------------------------------------------------- #
# Wrappers
# --------------------------------------------------------------------------- #
def layer_norm_pallas(x, alpha, bias, *, eps=1e-6, out_dtype=None):
    """LayerNormalization.forward(x) with scalar alpha/bias."""
    orig_shape = x.shape
    d = orig_shape[-1]
    out_dtype = out_dtype or x.dtype
    x2 = x.reshape(-1, d)
    n_rows = x2.shape[0]
    itemsize = max(jnp.dtype(x.dtype).itemsize, jnp.dtype(out_dtype).itemsize)
    tm = _pick_row_tile(n_rows, d, itemsize, num_refs=2)
    x2, n_pad = _pad_rows(x2, tm)
    grid = (n_pad // tm,)

    kernel = functools.partial(_layernorm_kernel, eps=eps, d=d)
    out = pl.pallas_call(
        kernel,
        out_shape=jax.ShapeDtypeStruct((n_pad, d), out_dtype),
        grid=grid,
        in_specs=[
            pl.BlockSpec(memory_space=pltpu.MemorySpace.SMEM),   # alpha (1,)
            pl.BlockSpec(memory_space=pltpu.MemorySpace.SMEM),   # bias  (1,)
            pl.BlockSpec((tm, d), lambda i: (i, 0)),             # x row tile
        ],
        out_specs=pl.BlockSpec((tm, d), lambda i: (i, 0)),
        compiler_params=pltpu.CompilerParams(
            dimension_semantics=("parallel",),
            vmem_limit_bytes=_VMEM_LIMIT_BYTES),
    )(alpha.astype(jnp.float32).reshape(-1),
      bias.astype(jnp.float32).reshape(-1),
      x2)
    if n_pad != n_rows:
        out = out[:n_rows]
    return out.reshape(orig_shape)


def residual_add_pallas(x, y):
    """x + dropout(y), dropout identity (p = 0 / eval). Pure HBM streamer."""
    orig_shape = x.shape
    d = orig_shape[-1]
    x2 = x.reshape(-1, d)
    y2 = y.reshape(-1, d)
    n_rows = x2.shape[0]
    itemsize = max(jnp.dtype(x.dtype).itemsize, jnp.dtype(y.dtype).itemsize)
    tm = _pick_row_tile(n_rows, d, itemsize, num_refs=3)
    x2, n_pad = _pad_rows(x2, tm)
    y2, _ = _pad_rows(y2, tm)
    grid = (n_pad // tm,)

    out = pl.pallas_call(
        _residual_add_kernel,
        out_shape=jax.ShapeDtypeStruct((n_pad, d), x.dtype),
        grid=grid,
        in_specs=[
            pl.BlockSpec((tm, d), lambda i: (i, 0)),
            pl.BlockSpec((tm, d), lambda i: (i, 0)),
        ],
        out_specs=pl.BlockSpec((tm, d), lambda i: (i, 0)),
        compiler_params=pltpu.CompilerParams(
            dimension_semantics=("parallel",),
            vmem_limit_bytes=_VMEM_LIMIT_BYTES),
    )(x2, y2)
    if n_pad != n_rows:
        out = out[:n_rows]
    return out.reshape(orig_shape)


def residual_connection(x, sublayer, alpha, bias, *, eps=1e-6,
                        use_pallas_add=False):
    """ResidualConnection.forward(x, sublayer) = x + dropout(sublayer(norm(x)))."""
    normed = layer_norm_pallas(x, alpha, bias, eps=eps)
    sub_out = sublayer(normed)            # arbitrary user callable (plain JAX)
    # TODO(synk): dropout with p > 0 (training) not implemented; identity only.
    if use_pallas_add:
        return residual_add_pallas(x, sub_out)
    # Default: plain jnp add. XLA fuses this into the sublayer's epilogue,
    # avoiding a whole extra HBM read/read/write pass (largest single win).
    return x + sub_out.astype(x.dtype)


# --------------------------------------------------------------------------- #
# Demo / self-check
# --------------------------------------------------------------------------- #
if __name__ == "__main__":
    key = jax.random.PRNGKey(0)
    kx, kw, kb, kx2 = jax.random.split(key, 4)

    EPS = 1e-6
    alpha = jnp.full((1,), 1.3, dtype=jnp.float32)   # LayerNormalization.alpha
    bias = jnp.full((1,), 0.2, dtype=jnp.float32)    # LayerNormalization.bias

    D = 128
    w_sub = jax.random.normal(kw, (D, D), dtype=jnp.float32) / jnp.sqrt(jnp.float32(D))
    b_sub = 0.1 * jax.random.normal(kb, (D,), dtype=jnp.float32)

    def sublayer(z):
        # Example sublayer (a simple Linear) — in the PyTorch module this is an
        # arbitrary callable passed to forward().
        return jnp.dot(z, w_sub, preferred_element_type=jnp.float32) + b_sub

    def reference(x):
        mean = jnp.mean(x, axis=-1, keepdims=True)
        std = jnp.sqrt(jnp.var(x, axis=-1, keepdims=True, ddof=1))  # torch.std
        normed_ref = alpha * (x - mean) / (std + EPS) + bias
        return x + sublayer(normed_ref)

    # Case 1: lane-aligned, row count divisible by the tile.
    x1 = jax.random.normal(kx, (2, 8, D), dtype=jnp.float32)
    ref1 = reference(x1)
    out1 = jax.block_until_ready(
        residual_connection(x1, sublayer, alpha, bias, eps=EPS))
    out1p = jax.block_until_ready(
        residual_connection(x1, sublayer, alpha, bias, eps=EPS, use_pallas_add=True))
    assert jnp.allclose(out1, ref1, rtol=1e-5, atol=1e-5), \
        f"fused add max_err={float(jnp.max(jnp.abs(out1 - ref1)))}"
    assert jnp.allclose(out1p, ref1, rtol=1e-5, atol=1e-5), \
        f"pallas add max_err={float(jnp.max(jnp.abs(out1p - ref1)))}"

    # Case 2: odd row count (3*5 = 15 rows) to exercise the padding path.
    x2 = jax.random.normal(kx2, (3, 5, D), dtype=jnp.float32)
    ref2 = reference(x2)
    out2 = jax.block_until_ready(
        residual_connection(x2, sublayer, alpha, bias, eps=EPS, use_pallas_add=True))
    assert jnp.allclose(out2, ref2, rtol=1e-5, atol=1e-5), \
        f"padded path max_err={float(jnp.max(jnp.abs(out2 - ref2)))}"

    print("KERNEL_OK")
</pallas_src>

<mosaic_0001>
module attributes {stable_mosaic.version = 11 : i64} {
  func.func @_layernorm_kernel(%arg0: i32, %arg1: memref<1xf32, #tpu.memory_space<smem>>, %arg2: memref<1xf32, #tpu.memory_space<smem>>, %arg3: memref<8x128xf32, #tpu.memory_space<vmem>>, %arg4: memref<8x128xf32, #tpu.memory_space<vmem>>) attributes {dimension_semantics = [#tpu.dimension_semantics<parallel>], iteration_bounds = array<i64: 2>, scalar_prefetch = 0 : i64, scratch_operands = 0 : i64, tpu.core_type = #tpu.core_type<tc>, window_params = [{transform_indices = @transform_0, window_bounds = array<i64: 1>}, {transform_indices = @transform_1, window_bounds = array<i64: 1>}, {transform_indices = @transform_2, window_bounds = array<i64: 8, 128>}, {transform_indices = @transform_3, window_bounds = array<i64: 8, 128>}]} {
    %c0 = arith.constant 0 : index
    %c0_0 = arith.constant 0 : index
    %0 = vector.load %arg3[%c0, %c0_0] : memref<8x128xf32, #tpu.memory_space<vmem>>, vector<8x128xf32>
    %cst = arith.constant dense<0.000000e+00> : vector<8xf32>
    %1 = vector.multi_reduction <add>, %0, %cst [1] : vector<8x128xf32> to vector<8xf32>
    %2 = vector.shape_cast %1 : vector<8xf32> to vector<8x1xf32>
    %cst_1 = arith.constant 1.280000e+02 : f32
    %3 = vector.broadcast %cst_1 : f32 to vector<8x1xf32>
    %4 = arith.divf %2, %3 : vector<8x1xf32>
    %5 = vector.broadcast %4 : vector<8x1xf32> to vector<8x128xf32>
    %6 = arith.subf %0, %5 : vector<8x128xf32>
    %7 = arith.mulf %6, %6 : vector<8x128xf32>
    %cst_2 = arith.constant dense<0.000000e+00> : vector<8xf32>
    %8 = vector.multi_reduction <add>, %7, %cst_2 [1] : vector<8x128xf32> to vector<8xf32>
    %9 = vector.shape_cast %8 : vector<8xf32> to vector<8x1xf32>
    %cst_3 = arith.constant 0.00787401571 : f32
    %10 = vector.broadcast %cst_3 : f32 to vector<8x1xf32>
    %11 = arith.mulf %9, %10 : vector<8x1xf32>
    %12 = math.sqrt %11 : vector<8x1xf32>
    %cst_4 = arith.constant 9.99999997E-7 : f32
    %13 = vector.broadcast %cst_4 : f32 to vector<8x1xf32>
    %14 = arith.addf %12, %13 : vector<8x1xf32>
    %cst_5 = arith.constant 1.000000e+00 : f32
    %15 = vector.broadcast %cst_5 : f32 to vector<8x1xf32>
    %16 = arith.divf %15, %14 : vector<8x1xf32>
    %c0_6 = arith.constant 0 : index
    %17 = memref.load %arg1[%c0_6] : memref<1xf32, #tpu.memory_space<smem>>
    %18 = vector.broadcast %17 : f32 to vector<8x1xf32>
    %19 = arith.mulf %18, %16 : vector<8x1xf32>
    %20 = vector.broadcast %19 : vector<8x1xf32> to vector<8x128xf32>
    %21 = arith.mulf %6, %20 : vector<8x128xf32>
    %c0_7 = arith.constant 0 : index
    %22 = memref.load %arg2[%c0_7] : memref<1xf32, #tpu.memory_space<smem>>
    %23 = vector.broadcast %22 : f32 to vector<8x128xf32>
    %24 = arith.addf %21, %23 : vector<8x128xf32>
    %c0_8 = arith.constant 0 : index
    %c0_9 = arith.constant 0 : index
    %25 = vector.load %arg4[%c0_8, %c0_9] : memref<8x128xf32, #tpu.memory_space<vmem>>, vector<8x128xf32>
    tpu.vector_store %arg4[%c0_8, %c0_9], %24 {strides = array<i32>} : memref<8x128xf32, #tpu.memory_space<vmem>>, vector<8x128xf32>,
    return
  }
  func.func @transform_0(%arg0: i32) -> i32 {
    %c0_i32 = arith.constant 0 : i32
    %c0_i32_0 = arith.constant 0 : i32
    return %c0_i32 : i32
  }
  func.func @transform_1(%arg0: i32) -> i32 {
    %c0_i32 = arith.constant 0 : i32
    %c0_i32_0 = arith.constant 0 : i32
    return %c0_i32 : i32
  }
  func.func @transform_2(%arg0: i32) -> (i32, i32) {
    %c0_i32 = arith.constant 0 : i32
    %c0_i32_0 = arith.constant 0 : i32
    return %arg0, %c0_i32 : i32, i32
  }
  func.func @transform_3(%arg0: i32) -> (i32, i32) {
    %c0_i32 = arith.constant 0 : i32
    %c0_i32_0 = arith.constant 0 : i32
    return %arg0, %c0_i32 : i32, i32
  }
}

</mosaic_0001>

<llo_original>
// kernel: tpu_custom_call.1
$region0: #{tpu_custom_call.1}
  #allocation0 [shape = 'u32[]', space=smem, size = 0x4, offset = 0x4, fixed_abs, tag = 'smem constant byte address 0x4 - core index']
  #allocation1 [shape = 'u32[144,128]{1,0:T(1,128)}', space=vmem, size = 0x12000, scoped, tag = 'internal scratch']
  #allocation2 [shape = 'f32[1]{0:T(128)S(6)}', space=smem, size = 0x200, scoped, tag = 'scoped memory for tpu_custom_call.1']
  #allocation3 [shape = 'f32[1]{0:T(128)S(6)}', space=smem, size = 0x200, scoped, tag = 'scoped memory for tpu_custom_call.1']
  %s0 = inlined_call_operand.<no memory space> [shape: f32[1], index: 0, kind: input, shape index: {}]
  %s1 = inlined_call_operand.<no memory space> [shape: f32[1], index: 1, kind: input, shape index: {}]
  %s2 = inlined_call_operand.hbm [shape: f32[16,128], index: 2, kind: input, shape index: {}]
  %s3 = inlined_call_operand.hbm [shape: f32[16,128], index: 3, kind: output, shape index: {}]
  %s4 = sld [smem:[#allocation0]]
  $region49: #{tpu_custom_call.1} parent=0
    _
  %s6 = ssub.s32 1, %s4
  %s7 = scalar_select 0, %s6, %s4
  %8 = sst [smem:[#allocation2]] %s0
  %9 = sst [smem:[#allocation3]] %s1
  $region1: #{tpu_custom_call.1} parent=0
    #allocation4 [shape = 'u8[8192]{0}', space=vmem, size = 0x2000, scoped, tag = 'input window, operand 2']
    #allocation5 [shape = 's32[2]{0}', space=sflag, size = 0x8, scoped, tag = 'scoped memory for tpu_custom_call.1']
    #allocation6 [shape = 's32[2]{0}', space=sflag, size = 0x8, scoped, tag = 'scoped memory for tpu_custom_call.1']
    #allocation7 [shape = 'u8[8192]{0}', space=vmem, size = 0x2000, scoped, tag = 'output window, operand 0']
    %10 = vsyncpa [#allocation5], 0
    %s11 = scalar_lea.sflag [#allocation5], 1
    %12 = vsyncpa %s11, 0
    %13 = vsyncpa [#allocation6], 0
    %s14 = scalar_lea.sflag [#allocation6], 1
    %15 = vsyncpa %s14, 0
    loop: start=0, step=1, limit=4
    $region2: #{tpu_custom_call.1} parent=1 // loop_pre_header
      _
    $region3: #{tpu_custom_call.1} parent=1 // loop_header
      %s17 = sphi 0, %s21
      %p18 = scmp.ge.s32.totalorder %s17, 4
      %s25 = sphi 0, %s25
      %s27 = sphi 0, %s25
      %s28 = sphi 0, %s27
      %s42 = sphi 0, %s28
      %s46 = sphi 0, %s46
      %s48 = sphi 0, %s46
      %s49 = sphi 0, %s48
      %s63 = sphi 0, %s49
      %s69 = sphi 0, %s71
      %s72 = sphi 0, %s69
      %s73 = sphi 0, %s72
      %s89 = sphi 0, %s73
      %s95 = sphi 0, %s97
      %s98 = sphi 0, %s95
      %s99 = sphi 0, %s98
      %s115 = sphi 0, %s99
    $region4: #{tpu_custom_call.1} parent=1 // loop_header_branch
      %20 = sbr.rel (%p18) target = $region8
    $region5: #{tpu_custom_call.1} parent=1 // loop_body
      %s22 = ssub.s32 %s17, 1
      %s23 = ssub.s32 %s17, 2
      %s24 = sadd.s32 %s17, 1
      %s26 = sadd.s32 %s25, 1
      %p29 = scmp.eq.s32.totalorder %s17, 1
      %p30 = scmp.ne.s32.totalorder %s25, %s27
      %p31 = scmp.eq.s32.totalorder %s17, 0
      %p32 = por %p30, %p31
      %p33 = scmp.ne.s32.totalorder %s25, %s27
      %p34 = scmp.eq.s32.totalorder %s22, 1
      %p35 = por %p33, %p34
      %p36 = scmp.ne.s32.totalorder %s27, %s28
      %p37 = scmp.eq.s32.totalorder %s22, 0
      %p38 = por %p36, %p37
      %p39 = scmp.ne.s32.totalorder %s27, %s28
      %p40 = scmp.eq.s32.totalorder %s23, 1
      %p41 = por %p39, %p40
      %p43 = scmp.ne.s32.totalorder %s28, %s42
      %p44 = scmp.eq.s32.totalorder %s23, 0
      %p45 = por %p43, %p44
      %s47 = sadd.s32 %s46, 1
      %p50 = scmp.eq.s32.totalorder %s17, 1
      %p51 = scmp.ne.s32.totalorder %s46, %s48
      %p52 = scmp.eq.s32.totalorder %s17, 0
      %p53 = por %p51, %p52
      %p54 = scmp.ne.s32.totalorder %s46, %s48
      %p55 = scmp.eq.s32.totalorder %s22, 1
      %p56 = por %p54, %p55
      %p57 = scmp.ne.s32.totalorder %s48, %s49
      %p58 = scmp.eq.s32.totalorder %s22, 0
      %p59 = por %p57, %p58
      %p60 = scmp.ne.s32.totalorder %s48, %s49
      %p61 = scmp.eq.s32.totalorder %s23, 1
      %p62 = por %p60, %p61
      %p64 = scmp.ne.s32.totalorder %s49, %s63
      %p65 = scmp.eq.s32.totalorder %s23, 0
      %p66 = por %p64, %p65
      %s67 = ssub.s32 %s17, %s24
      %p68 = scmp.eq.s32.totalorder %s67, 0
      %s70 = sadd.s32 %s69, 1
      %s71 = scalar_select %p68, %s69, %s70
      %p74 = pneg %p68
      %p75 = scmp.eq.s32.totalorder %s17, 1
      %p76 = por %p74, %p75
      %p77 = scmp.ne.s32.totalorder %s69, %s72
      %p78 = scmp.eq.s32.totalorder %s17, 0
      %p79 = por %p77, %p78
      %p80 = scmp.ne.s32.totalorder %s69, %s72
      %p81 = scmp.eq.s32.totalorder %s22, 1
      %p82 = por %p80, %p81
      %p83 = scmp.ne.s32.totalorder %s72, %s73
      %p84 = scmp.eq.s32.totalorder %s22, 0
      %p85 = por %p83, %p84
      %p86 = scmp.ne.s32.totalorder %s72, %s73
      %p87 = scmp.eq.s32.totalorder %s23, 1
      %p88 = por %p86, %p87
      %p90 = scmp.ne.s32.totalorder %s73, %s89
      %p91 = scmp.eq.s32.totalorder %s23, 0
      %p92 = por %p90, %p91
      %s93 = ssub.s32 %s17, %s24
      %p94 = scmp.eq.s32.totalorder %s93, 0
      %s96 = sadd.s32 %s95, 1
      %s97 = scalar_select %p94, %s95, %s96
      %p100 = pneg %p94
      %p101 = scmp.eq.s32.totalorder %s17, 1
      %p102 = por %p100, %p101
      %p103 = scmp.ne.s32.totalorder %s95, %s98
      %p104 = scmp.eq.s32.totalorder %s17, 0
      %p105 = por %p103, %p104
      %p106 = scmp.ne.s32.totalorder %s95, %s98
      %p107 = scmp.eq.s32.totalorder %s22, 1
      %p108 = por %p106, %p107
      %p109 = scmp.ne.s32.totalorder %s98, %s99
      %p110 = scmp.eq.s32.totalorder %s22, 0
      %p111 = por %p109, %p110
      %p112 = scmp.ne.s32.totalorder %s98, %s99
      %p113 = scmp.eq.s32.totalorder %s23, 1
      %p114 = por %p112, %p113
      %p116 = scmp.ne.s32.totalorder %s99, %s115
      %p117 = scmp.eq.s32.totalorder %s23, 0
      %p118 = por %p116, %p117
      %p119 = scmp.le.s32.totalorder 1, %s17
      %p120 = scmp.lt.s32.totalorder %s17, 3
      %p121 = pnand %p119, %p120
      %p122 = pneg %p121
      // Predicated region
      $region9: #{tpu_custom_call.1} parent=5 // pred_check
        _
      $region10: #{tpu_custom_call.1} parent=5 // pred_check_branch
        %124 = sbr.rel (%p121) target = $region12
      $region11: #{tpu_custom_call.1} parent=5 // pred_region
        %s125 = ssub.s32 %s17, 1
        // Predicated region
        $region13: #{tpu_custom_call.1} parent=11 // pred_check
          %p126 = pneg %p38
        $region14: #{tpu_custom_call.1} parent=11 // pred_check_branch
          %128 = sbr.rel (%p126) target = $region16
        $region15: #{tpu_custom_call.1} parent=11 // pred_region
          _
        $region16: #{tpu_custom_call.1} parent=11 // pred_fallthru
          _
        // Predicated region
        $region17: #{tpu_custom_call.1} parent=11 // pred_check
          %p129 = pneg %p59
        $region18: #{tpu_custom_call.1} parent=11 // pred_check_branch
          %131 = sbr.rel (%p129) target = $region20
        $region19: #{tpu_custom_call.1} parent=11 // pred_region
          _
        $region20: #{tpu_custom_call.1} parent=11 // pred_fallthru
          _
      $region12: #{tpu_custom_call.1} parent=5 // pred_fallthru
        _
      %p132 = scmp.lt.s32.totalorder %s17, 2
      // Predicated region
      $region21: #{tpu_custom_call.1} parent=5 // pred_check
        %p133 = pneg %p132
      $region22: #{tpu_custom_call.1} parent=5 // pred_check_branch
        %135 = sbr.rel (%p133) target = $region24
      $region23: #{tpu_custom_call.1} parent=5 // pred_region
        // Predicated region
        $region25: #{tpu_custom_call.1} parent=23 // pred_check
          %p136 = pneg %p79
        $region26: #{tpu_custom_call.1} parent=23 // pred_check_branch
          %138 = sbr.rel (%p136) target = $region28
        $region27: #{tpu_custom_call.1} parent=23 // pred_region
          %s139 = sand.u32 %s69, 1
          %s140 = scalar_lea.sflag [#allocation5], %s139
          %s141 = sand.u32 %s69, 1
          %s142 = smul.addr %s141, 8
          %s143 = scalar_lea.vmem [#allocation4], %s142
          %s145 = ssub.s32 128, 128
          %146 = vsyncadd %s140, %s145
          %s147 = smul.addr %s17, 128
          %s148 = scalar_lea.hbm %s2, %s147
          %s150 = sshll.u32 %s143, 4
          %s151 = int_to_ptr.vmem [resolvable:$true] %s150
          %153 = dma.hbm_to_vmem [thread:$0]  %s148, 128, %s151, %s140
        $region28: #{tpu_custom_call.1} parent=23 // pred_fallthru
          _
      $region24: #{tpu_custom_call.1} parent=5 // pred_fallthru
        _
      %p154 = scmp.le.s32.totalorder 1, %s17
      %p155 = scmp.lt.s32.totalorder %s17, 3
      %p156 = pnand %p154, %p155
      %p157 = pneg %p156
      // Predicated region
      $region29: #{tpu_custom_call.1} parent=5 // pred_check
        _
      $region30: #{tpu_custom_call.1} parent=5 // pred_check_branch
        %159 = sbr.rel (%p156) target = $region32
      $region31: #{tpu_custom_call.1} parent=5 // pred_region
        %s160 = ssub.s32 %s17, 1
        %s161 = sand.u32 %s72, 1
        %s162 = scalar_lea.sflag [#allocation5], %s161
        %s163 = sand.u32 %s72, 1
        %s164 = smul.addr %s163, 8
        %s165 = scalar_lea.vmem [#allocation4], %s164
        // Predicated region
        $region33: #{tpu_custom_call.1} parent=31 // pred_check
          %p166 = pneg %p85
        $region34: #{tpu_custom_call.1} parent=31 // pred_check_branch
          %168 = sbr.rel (%p166) target = $region36
        $region35: #{tpu_custom_call.1} parent=31 // pred_region
          %169 = dma.done %s162, 128
        $region36: #{tpu_custom_call.1} parent=31 // pred_fallthru
          _
        %p170 = pneg %p38
        %p171 = pneg %p35
        %p172 = pneg %p59
        %p173 = pneg %p56
        %s174 = sand.u32 %s72, 1
        %s175 = scalar_lea.sflag [#allocation5], %s174
        %s176 = sand.u32 %s72, 1
        %s177 = smul.addr %s176, 8
        %s178 = scalar_lea.vmem [#allocation4], %s177
        %p179 = pneg %p85
        %p180 = pneg %p82
        %p181 = pneg %p111
        %p182 = pneg %p108
        %s183 = sand.u32 %s98, 1
        %s184 = scalar_lea.sflag [#allocation6], %s183
        %s185 = sand.u32 %s98, 1
        %s186 = smul.addr %s185, 8
        %s187 = scalar_lea.vmem [#allocation7], %s186
        %v188 = vld [vmem:[%s165] sm:$0xff]
        %189 = vadd.xlane.f32.xlu0 %v188
        %v190 = vpop.xlane.xlu0 %189
        %v191 = vrcp.pop 128.0
        %v192 = vmul.f32 %v190, %v191
        %v193 = vsub.f32 %v188, %v192
        %v194 = vmul.f32 %v193, %v193
        %195 = vadd.xlane.f32.xlu0 %v194
        %v196 = vpop.xlane.xlu0 %195
        %v197 = vmul.f32 %v196, 0.007874016
        %v198 = vrsqrt.pop %v197
        %v199 = vmul.f32 %v197, %v198
        %vm200 = vcmp.eq.f32.partialorder %v197, inf
        %v201 = vsel %vm200, %v197, %v199
        %vm202 = vcmp.eq.f32.partialorder %v197, 0.0
        %v203 = vand.u32 %v197, 2147483648
        %v204 = vsel %vm202, %v203, %v201
        %v205 = vadd.f32 %v204, 1e-06
        %v206 = vrcp.pop %v205
        %v207 = vmul.f32 1.0, %v206
        %s208 = sld [smem:[#allocation2]]
        %v209 = vstv %s208
        %v210 = vmul.f32 %v209, %v207
        %v211 = vmul.f32 %v193, %v210
        %s212 = sld [smem:[#allocation3]]
        %v213 = vstv %s212
        %v214 = vadd.f32 %v211, %v213
        %215 = vst [vmem:[%s187] sm:$0xff] %v214
        %s216 = sand.u32 %s98, 1
        %s217 = scalar_lea.sflag [#allocation6], %s216
        %s218 = sand.u32 %s98, 1
        %s219 = smul.addr %s218, 8
        %s220 = scalar_lea.vmem [#allocation7], %s219
        // Predicated region
        $region37: #{tpu_custom_call.1} parent=31 // pred_check
          %p221 = pneg %p108
        $region38: #{tpu_custom_call.1} parent=31 // pred_check_branch
          %223 = sbr.rel (%p221) target = $region40
        $region39: #{tpu_custom_call.1} parent=31 // pred_region
          %s225 = ssub.s32 128, 128
          %226 = vsyncadd %s217, %s225
          %s227 = smul.addr %s22, 128
          %s228 = scalar_lea.hbm %s3, %s227
          %s230 = sshll.u32 %s220, 4
          %s231 = int_to_ptr.vmem [resolvable:$true] %s230
          %233 = dma.vmem_to_hbm [thread:$0]  %s231, 128, %s228, %s217
        $region40: #{tpu_custom_call.1} parent=31 // pred_fallthru
          _
      $region32: #{tpu_custom_call.1} parent=5 // pred_fallthru
        _
      %p234 = scmp.le.s32.totalorder 2, %s17
      // Predicated region
      $region41: #{tpu_custom_call.1} parent=5 // pred_check
        %p235 = pneg %p234
      $region42: #{tpu_custom_call.1} parent=5 // pred_check_branch
        %237 = sbr.rel (%p235) target = $region44
      $region43: #{tpu_custom_call.1} parent=5 // pred_region
        %s238 = ssub.s32 %s17, 2
        // Predicated region
        $region45: #{tpu_custom_call.1} parent=43 // pred_check
          %p239 = pneg %p114
        $region46: #{tpu_custom_call.1} parent=43 // pred_check_branch
          %241 = sbr.rel (%p239) target = $region48
        $region47: #{tpu_custom_call.1} parent=43 // pred_region
          %s242 = sand.u32 %s99, 1
          %s243 = scalar_lea.sflag [#allocation6], %s242
          %s244 = sand.u32 %s99, 1
          %s245 = smul.addr %s244, 8
          %s246 = scalar_lea.vmem [#allocation7], %s245
          %247 = dma.done %s243, 128
        $region48: #{tpu_custom_call.1} parent=43 // pred_fallthru
          _
      $region44: #{tpu_custom_call.1} parent=5 // pred_fallthru
        _
    $region6: #{tpu_custom_call.1} parent=1 // loop_footer
      %s21 = sadd.s32 1, %s17
    $region7: #{tpu_custom_call.1} parent=1 // loop_footer_branch
      %16 = sbr.rel target = $region3
    $region8: #{tpu_custom_call.1} parent=1 // loop_exit
      _
    %248 = vsyncpa [#allocation5], 1
    %s249 = scalar_lea.sflag [#allocation5], 1
    %250 = vsyncpa %s249, 1
    %251 = vsyncpa [#allocation6], 1
    %s252 = scalar_lea.sflag [#allocation6], 1
    %253 = vsyncpa %s252, 1

</llo_original>
